<compile_context>
chip_gen: v7x
topology: tpu7x:2x2x1
jax: 0.10.0
libtpu: 0.0.40
codegen_flags: <defaults>
</compile_context>

<pallas_src>
import functools

import jax
import jax.numpy as jnp
from jax.experimental import pallas as pl
from jax.experimental.pallas import tpu as pltpu


def _smooth_ce_rowloss_kernel(col_ref, x_ref, t_ref, loss_ref, *,
                              confidence, smooth_over_c):
    """Per-row label-smoothed CE for one (row_tile, C) block of logits.

    loss_row = logsumexp(x) - confidence * x[target] - (smoothing/C) * sum(x)
    which is algebraically identical to confidence*nll + smoothing*smooth_loss.
    """
    x = x_ref[...]                       # (TN, C), native dtype (f32 or bf16)
    t = t_ref[...]                       # (TN, 1) int32
    col = col_ref[...]                   # (1, C) int32, resident across tiles

    # Row max + logsumexp.  Only the exp/log path is widened to f32; the
    # max / compare / select / row-sums stay in the input dtype with f32
    # accumulation (bf16-native on v6e/v7x; hidden under DMA on v5e).
    m = jnp.max(x, axis=-1, keepdims=True)                            # (TN, 1)
    sum_exp = jnp.sum(jnp.exp((x - m).astype(jnp.float32)),
                      axis=-1, keepdims=True)                         # (TN, 1) f32
    lse = m.astype(jnp.float32) + jnp.log(sum_exp)                    # full LSE

    # Target logit (masked sum over the resident column iota) and row sum,
    # taken directly from x: no (TN, C) f32 `z` temporary is ever live.
    x_t = jnp.sum(jnp.where(col == t, x, jnp.zeros((), x.dtype)),
                  axis=-1, keepdims=True, dtype=jnp.float32)          # (TN, 1)
    sum_x = jnp.sum(x, axis=-1, keepdims=True, dtype=jnp.float32)     # (TN, 1)

    loss_ref[...] = lse - confidence * x_t - smooth_over_c * sum_x


def _round_up(a, b):
    return ((a + b - 1) // b) * b


def _vmem_budgets():
    """Returns (in-kernel working-set budget, scoped vmem limit) per generation."""
    try:
        cap = int(pltpu.get_tpu_info().vmem_capacity_bytes)
    except Exception:
        cap = 64 * 1024 * 1024            # be conservative: assume v7x-sized VMEM
    if cap >= 100 * 1024 * 1024:          # v5e / v6e: 128 MiB physical VMEM
        return 48 * 1024 * 1024, 64 * 1024 * 1024
    # v7x: 64 MiB physical -> keep double-buffered blocks + f32 temps small.
    return 20 * 1024 * 1024, 32 * 1024 * 1024


def _pick_row_tile(n, c, x_dtype, working_set_budget):
    """Largest row tile whose full in-kernel working set fits the budget."""
    itemsize = jnp.dtype(x_dtype).itemsize
    sublane = 16 if itemsize == 2 else 8
    # Per-row cost: 2x double-buffered input block at native width
    # plus ~2 f32-wide temporaries for the exp / logsumexp path.
    per_row_bytes = c * (2 * itemsize + 2 * 4)
    max_rows = max(sublane, working_set_budget // per_row_bytes)
    max_rows = min(max_rows, 32768)       # sanity bound on aspect ratio, not a cap
    max_rows = max(sublane, (max_rows // sublane) * sublane)

    # Split rows as evenly as possible over the minimum number of tiles so the
    # batch padding stays < one sublane group per tile.
    n_sub = _round_up(n, sublane)
    num_tiles = -(-n_sub // max_rows)
    row_tile = _round_up(-(-n_sub // num_tiles), sublane)
    return row_tile


def smooth_cross_entropy_v2(x, target, label_smoothing=0.1):
    """x: (N, C) float logits, target: (N,) int labels -> scalar mean loss."""
    assert label_smoothing < 1.0
    n, c = x.shape
    working_set_budget, vmem_limit = _vmem_budgets()
    row_tile = _pick_row_tile(n, c, x.dtype, working_set_budget)
    n_padded = _round_up(n, row_tile)

    if n_padded != n:
        # Padded rows produce finite, unused losses; sliced off before the mean.
        x = jnp.pad(x, ((0, n_padded - n), (0, 0)))
        target = jnp.pad(target, (0, n_padded - n))
    t2d = target.astype(jnp.int32).reshape(n_padded, 1)
    col = jnp.arange(c, dtype=jnp.int32).reshape(1, c)

    kernel = functools.partial(
        _smooth_ce_rowloss_kernel,
        confidence=float(1.0 - label_smoothing),
        smooth_over_c=float(label_smoothing) / float(c),
    )

    # TODO(synk): for vocab-scale C (>= ~256k) add a second grid axis over C
    # with an online logsumexp (m/l/x_t/sum_x accumulators in VMEM scratch,
    # finalize under pl.when(last)) so blocks stay large in both dims.
    per_row = pl.pallas_call(
        kernel,
        out_shape=jax.ShapeDtypeStruct((n_padded, 1), jnp.float32),
        grid_spec=pltpu.PrefetchScalarGridSpec(
            num_scalar_prefetch=0,
            grid=(n_padded // row_tile,),
            in_specs=[
                pl.BlockSpec((1, c), lambda i: (0, 0)),          # column iota (resident)
                pl.BlockSpec((row_tile, c), lambda i: (i, 0)),   # logits tile
                pl.BlockSpec((row_tile, 1), lambda i: (i, 0)),   # targets tile
            ],
            out_specs=pl.BlockSpec((row_tile, 1), lambda i: (i, 0)),
        ),
        compiler_params=pltpu.CompilerParams(
            # Independent per-tile outputs -> shardable across v7x's 2 TCs.
            dimension_semantics=("parallel",),
            vmem_limit_bytes=vmem_limit,
        ),
    )(col, x, t2d)

    # Tiny final reduction in plain JAX (also drops any batch padding).
    return jnp.mean(per_row[:n, 0])


def _reference(x, target, label_smoothing=0.1):
    confidence = 1.0 - label_smoothing
    logprobs = jax.nn.log_softmax(x.astype(jnp.float32), axis=-1)
    nll = -jnp.take_along_axis(logprobs, target[:, None], axis=-1)[:, 0]
    smooth = -jnp.mean(logprobs, axis=-1)
    return jnp.mean(confidence * nll + label_smoothing * smooth)


if __name__ == "__main__":
    key = jax.random.PRNGKey(0)
    k1, k2, k3, k4, k5, k6 = jax.random.split(key, 6)

    # Case 1: batch=8, classes=128, f32.
    x1 = jax.random.normal(k1, (8, 128), dtype=jnp.float32)
    t1 = jax.random.randint(k2, (8,), 0, 128, dtype=jnp.int32)
    loss1 = jax.block_until_ready(smooth_cross_entropy_v2(x1, t1, 0.1))
    ref1 = _reference(x1, t1, 0.1)
    assert jnp.allclose(loss1, ref1, atol=1e-5, rtol=1e-5), (loss1, ref1)

    # Case 2: batch not a multiple of the sublane tile (exercises padding path).
    x2 = jax.random.normal(k3, (12, 384), dtype=jnp.float32)
    t2 = jax.random.randint(k4, (12,), 0, 384, dtype=jnp.int32)
    loss2 = jax.block_until_ready(smooth_cross_entropy_v2(x2, t2, 0.1))
    ref2 = _reference(x2, t2, 0.1)
    assert jnp.allclose(loss2, ref2, atol=1e-5, rtol=1e-5), (loss2, ref2)

    # Case 3: bf16 logits (exercises the bf16-native path, sublane=16).
    x3 = jax.random.normal(k5, (16, 256), dtype=jnp.bfloat16)
    t3 = jax.random.randint(k6, (16,), 0, 256, dtype=jnp.int32)
    loss3 = jax.block_until_ready(smooth_cross_entropy_v2(x3, t3, 0.1))
    ref3 = _reference(x3, t3, 0.1)
    assert jnp.allclose(loss3, ref3, atol=5e-2, rtol=5e-2), (loss3, ref3)

    print("KERNEL_OK")
</pallas_src>

<mosaic_0001>
module attributes {stable_mosaic.version = 11 : i64} {
  func.func @_smooth_ce_rowloss_kernel(%arg0: i32, %arg1: memref<1x128xi32, #tpu.memory_space<vmem>>, %arg2: memref<8x128xf32, #tpu.memory_space<vmem>>, %arg3: memref<8x1xi32, #tpu.memory_space<vmem>>, %arg4: memref<8x1xf32, #tpu.memory_space<vmem>>) attributes {dimension_semantics = [#tpu.dimension_semantics<parallel>], iteration_bounds = array<i64: 1>, scalar_prefetch = 0 : i64, scratch_operands = 0 : i64, tpu.core_type = #tpu.core_type<tc>, window_params = [{pipeline_mode = #tpu.pipeline_mode<synchronous>, transform_indices = @transform_0, window_bounds = array<i64: 1, 128>}, {transform_indices = @transform_1, window_bounds = array<i64: 8, 128>}, {transform_indices = @transform_2, window_bounds = array<i64: 8, 1>}, {transform_indices = @transform_3, window_bounds = array<i64: 8, 1>}]} {
    %c0 = arith.constant 0 : index
    %c0_0 = arith.constant 0 : index
    %0 = vector.load %arg2[%c0, %c0_0] : memref<8x128xf32, #tpu.memory_space<vmem>>, vector<8x128xf32>
    %c0_1 = arith.constant 0 : index
    %c0_2 = arith.constant 0 : index
    %1 = vector.load %arg3[%c0_1, %c0_2] : memref<8x1xi32, #tpu.memory_space<vmem>>, vector<8x1xi32>
    %c0_3 = arith.constant 0 : index
    %c0_4 = arith.constant 0 : index
    %2 = vector.load %arg1[%c0_3, %c0_4] : memref<1x128xi32, #tpu.memory_space<vmem>>, vector<1x128xi32>
    %cst = arith.constant dense<0xFF800000> : vector<8xf32>
    %3 = vector.multi_reduction <maximumf>, %0, %cst [1] : vector<8x128xf32> to vector<8xf32>
    %4 = vector.shape_cast %3 : vector<8xf32> to vector<8x1xf32>
    %5 = vector.broadcast %4 : vector<8x1xf32> to vector<8x128xf32>
    %6 = arith.subf %0, %5 : vector<8x128xf32>
    %7 = math.exp %6 : vector<8x128xf32>
    %cst_5 = arith.constant dense<0.000000e+00> : vector<8xf32>
    %8 = vector.multi_reduction <add>, %7, %cst_5 [1] : vector<8x128xf32> to vector<8xf32>
    %9 = vector.shape_cast %8 : vector<8xf32> to vector<8x1xf32>
    %10 = math.log %9 : vector<8x1xf32>
    %11 = arith.addf %4, %10 : vector<8x1xf32>
    %12 = vector.broadcast %2 : vector<1x128xi32> to vector<8x128xi32>
    %13 = vector.broadcast %1 : vector<8x1xi32> to vector<8x128xi32>
    %14 = arith.cmpi eq, %12, %13 : vector<8x128xi32>
    %cst_6 = arith.constant 0.000000e+00 : f32
    %15 = vector.broadcast %cst_6 : f32 to vector<8x128xf32>
    %16 = arith.select %14, %0, %15 : vector<8x128xi1>, vector<8x128xf32>
    %cst_7 = arith.constant dense<0.000000e+00> : vector<8xf32>
    %17 = vector.multi_reduction <add>, %16, %cst_7 [1] : vector<8x128xf32> to vector<8xf32>
    %18 = vector.shape_cast %17 : vector<8xf32> to vector<8x1xf32>
    %cst_8 = arith.constant dense<0.000000e+00> : vector<8xf32>
    %19 = vector.multi_reduction <add>, %0, %cst_8 [1] : vector<8x128xf32> to vector<8xf32>
    %20 = vector.shape_cast %19 : vector<8xf32> to vector<8x1xf32>
    %cst_9 = arith.constant 0.899999976 : f32
    %21 = vector.broadcast %cst_9 : f32 to vector<8x1xf32>
    %22 = arith.mulf %21, %18 : vector<8x1xf32>
    %23 = arith.subf %11, %22 : vector<8x1xf32>
    %cst_10 = arith.constant 7.812500e-04 : f32
    %24 = vector.broadcast %cst_10 : f32 to vector<8x1xf32>
    %25 = arith.mulf %24, %20 : vector<8x1xf32>
    %26 = arith.subf %23, %25 : vector<8x1xf32>
    %c0_11 = arith.constant 0 : index
    %c0_12 = arith.constant 0 : index
    %27 = vector.load %arg4[%c0_11, %c0_12] : memref<8x1xf32, #tpu.memory_space<vmem>>, vector<8x1xf32>
    tpu.vector_store %arg4[%c0_11, %c0_12], %26 {strides = array<i32>} : memref<8x1xf32, #tpu.memory_space<vmem>>, vector<8x1xf32>,
    return
  }
  func.func @transform_0(%arg0: i32) -> (i32, i32) {
    %c0_i32 = arith.constant 0 : i32
    %c0_i32_0 = arith.constant 0 : i32
    %c0_i32_1 = arith.constant 0 : i32
    return %c0_i32, %c0_i32_0 : i32, i32
  }
  func.func @transform_1(%arg0: i32) -> (i32, i32) {
    %c0_i32 = arith.constant 0 : i32
    %c0_i32_0 = arith.constant 0 : i32
    return %arg0, %c0_i32 : i32, i32
  }
  func.func @transform_2(%arg0: i32) -> (i32, i32) {
    %c0_i32 = arith.constant 0 : i32
    %c0_i32_0 = arith.constant 0 : i32
    return %arg0, %c0_i32 : i32, i32
  }
  func.func @transform_3(%arg0: i32) -> (i32, i32) {
    %c0_i32 = arith.constant 0 : i32
    %c0_i32_0 = arith.constant 0 : i32
    return %arg0, %c0_i32 : i32, i32
  }
}

</mosaic_0001>

<llo_original>
// kernel: tpu_custom_call.1
$region0: #{tpu_custom_call.1}
  #allocation0 [shape = 'u32[]', space=smem, size = 0x4, offset = 0x4, fixed_abs, tag = 'smem constant byte address 0x4 - core index']
  #allocation1 [shape = 'u32[144,128]{1,0:T(1,128)}', space=vmem, size = 0x12000, scoped, tag = 'internal scratch']
  %s0 = inlined_call_operand.vmem [shape: s32[1,128], index: 0, kind: input, shape index: {}]
  %s1 = inlined_call_operand.vmem [shape: f32[8,128], index: 1, kind: input, shape index: {}]
  %s2 = inlined_call_operand.vmem [shape: s32[8,1], index: 2, kind: input, shape index: {}]
  %s3 = inlined_call_operand.vmem [shape: f32[8,1], index: 3, kind: output, shape index: {}]
  %s4 = sld [smem:[#allocation0]]
  $region22: #{tpu_custom_call.1} parent=0
    _
  %s6 = ssub.s32 1, %s4
  %s7 = scalar_select 0, %s6, %s4
  // Predicated region
  $region2: #{tpu_custom_call.1} parent=0 // pred_check
    _
  $region3: #{tpu_custom_call.1} parent=0 // pred_check_branch
    %9 = sbr.rel (0) target = $region5
  $region4: #{tpu_custom_call.1} parent=0 // pred_region
    _
  $region5: #{tpu_custom_call.1} parent=0 // pred_fallthru
    _
  // Predicated region
  $region6: #{tpu_custom_call.1} parent=0 // pred_check
    _
  $region7: #{tpu_custom_call.1} parent=0 // pred_check_branch
    %11 = sbr.rel (0) target = $region9
  $region8: #{tpu_custom_call.1} parent=0 // pred_region
    _
  $region9: #{tpu_custom_call.1} parent=0 // pred_fallthru
    _
  // Predicated region
  $region10: #{tpu_custom_call.1} parent=0 // pred_check
    _
  $region11: #{tpu_custom_call.1} parent=0 // pred_check_branch
    %13 = sbr.rel (0) target = $region13
  $region12: #{tpu_custom_call.1} parent=0 // pred_region
    _
  $region13: #{tpu_custom_call.1} parent=0 // pred_fallthru
    _
  %v14 = vld [vmem:[%s1] sm:$0xff]
  %v15 = vld [vmem:[%s2] sm:$0xff]
  %v16 = vld [vmem:[%s0] sm:$0x1]
  %17 = vmax.xlane.f32.xlu0 %v14
  %v18 = vpop.xlane.xlu0 %17
  %v19 = vsub.f32 %v14, %v18
  %v20 = vmul.f32 %v19, 1.442695
  %v21 = vpow.pop %v20
  %22 = vadd.xlane.f32.xlu0 %v21
  %v23 = vpop.xlane.xlu0 %22
  %v24 = vlog2.pop %v23
  %v25 = vmul.f32 %v24, 0.6931472
  %v26 = vadd.f32 %v18, %v25
  %v27 = vlaneseq
  %v28 = vshrl.u32 %v27, 7
  %v29 = vsub.s32 0, %v28
  %v30 = vrot.slane %v16, %v29
  %31 = vset.pattern.permute.xlu0 0
  %32 = vperm.xlu0 %31, %v15
  %v33 = vpop.permute.xlu0 %32
  %vm34 = vcmp.eq.s32.totalorder %v30, %v33
  %v35 = vsel %vm34, %v14, 0.0
  %36 = vadd.xlane.f32.xlu0 %v35
  %v37 = vpop.xlane.xlu0 %36
  %38 = vadd.xlane.f32.xlu0 %v14
  %v39 = vpop.xlane.xlu0 %38
  %v40 = vmul.f32 %v37, 0.9
  %v41 = vsub.f32 %v26, %v40
  %v42 = vmul.f32 %v39, 0.00078125
  %v43 = vsub.f32 %v41, %v42
  %vm44 = vcmask 7168
  %45 = vst.msk [vmem:[%s3] sm:$0xff] %vm44, %v43
  // Predicated region
  $region14: #{tpu_custom_call.1} parent=0 // pred_check
    _
  $region15: #{tpu_custom_call.1} parent=0 // pred_check_branch
    %47 = sbr.rel (0) target = $region17
  $region16: #{tpu_custom_call.1} parent=0 // pred_region
    _
  $region17: #{tpu_custom_call.1} parent=0 // pred_fallthru
    _
  // Predicated region
  $region18: #{tpu_custom_call.1} parent=0 // pred_check
    _
  $region19: #{tpu_custom_call.1} parent=0 // pred_check_branch
    %49 = sbr.rel (0) target = $region21
  $region20: #{tpu_custom_call.1} parent=0 // pred_region
    _
  $region21: #{tpu_custom_call.1} parent=0 // pred_fallthru
    _

</llo_original>
